<compile_context>
chip_gen: v7x
topology: tpu7x:2x2x1
jax: 0.10.0
libtpu: 0.0.40
codegen_flags: <defaults>
</compile_context>

<pallas_src>
import numpy as np
import jax
import jax.numpy as jnp
from jax.experimental import pallas as pl
from jax.experimental.pallas import tpu as pltpu


# ----------------------------------------------------------------------------
# Bilinear interpolation matrices (PyTorch align_corners=False convention),
# transposed for channel-major right-multiplication: out = in @ M^T.
# ----------------------------------------------------------------------------
def _linear_interp_matrix(out_size, in_size):
    L = np.zeros((out_size, in_size), dtype=np.float32)
    if in_size == 1:
        L[:, 0] = 1.0
        return L
    scale = in_size / out_size
    for i in range(out_size):
        src = scale * (i + 0.5) - 0.5
        src = max(src, 0.0)                      # PyTorch clamps negative src
        x0 = min(int(np.floor(src)), in_size - 1)
        x1 = min(x0 + 1, in_size - 1)
        lam = src - x0
        L[i, x0] += 1.0 - lam
        L[i, x1] += lam
    return L


def bilinear_matrix_T(out_hw, in_hw):
    """(Hin*Win, Hout*Wout) matrix M^T such that flat_out = flat_in @ M^T."""
    Lh = _linear_interp_matrix(out_hw[0], in_hw[0])
    Lw = _linear_interp_matrix(out_hw[1], in_hw[1])
    return np.ascontiguousarray(np.kron(Lh, Lw).T)


# ----------------------------------------------------------------------------
# Fused kernel: theta, phi, bilinear-up, relu, psi, sigmoid, bilinear-up,
# gating, w-conv and cross-batch BatchNorm — all in one invocation.
# ----------------------------------------------------------------------------
def _make_kernel(B, Cin, Cg, Ci, Ck, S, o_theta, o_phi, o_w, o_vec):

    def kernel(x_ref, xp_ref, g_ref, pk_ref, ipg_ref, ips_ref,
               wy_ref, sigm_ref):
        # --- unpack the single consolidated parameter block (static slices) ---
        pk = pk_ref[...]
        theta_w = pk[0:Ci,  o_theta:o_theta + Ck]      # (Ci, Cin*kh*kw)
        phi_w   = pk[0:Ci,  o_phi:o_phi + Cg]          # (Ci, Cg)
        w_w     = pk[0:Cin, o_w:o_w + Cin]             # (Cin, Cin)
        phi_b   = pk[0:Ci,  o_vec + 0:o_vec + 1]       # (Ci, 1)
        psi_w   = pk[0:Ci,  o_vec + 1:o_vec + 2]       # (Ci, 1)
        psi_b   = pk[0:1,   o_vec + 2:o_vec + 3]       # (1, 1)
        w_b     = pk[0:Cin, o_vec + 3:o_vec + 4]       # (Cin, 1)
        gamma   = pk[0:Cin, o_vec + 4:o_vec + 5]       # (Cin, 1)
        beta    = pk[0:Cin, o_vec + 5:o_vec + 6]       # (Cin, 1)

        ipg = ipg_ref[...]                             # (Sg, Ss)
        ips = ips_ref[...]                             # (Ss, S)

        wys = []
        ch_sum = jnp.zeros((Cin, 1), jnp.float32)
        for b in range(B):                             # tiny static unrolled loop
            x  = x_ref[b]                              # (Cin, S)
            xp = xp_ref[b]                             # (Ck,  Ss)
            g  = g_ref[b]                              # (Cg,  Sg)

            # theta_x = Conv(k=2, s=2, no bias): (out,in_flat) @ patches
            theta_x = jnp.dot(theta_w, xp, preferred_element_type=jnp.float32)     # (Ci, Ss)
            # phi_g = Conv1x1(g) + bias, bilinear resize to theta_x grid
            phi_g  = jnp.dot(phi_w, g, preferred_element_type=jnp.float32) + phi_b  # (Ci, Sg)
            phi_up = jnp.dot(phi_g, ipg, preferred_element_type=jnp.float32)        # (Ci, Ss)

            f = jnp.maximum(theta_x + phi_up, 0.0)                                   # (Ci, Ss)

            # psi: inter_channels -> 1 on the VPU (weighted sublane sum)
            psi_f = jnp.sum(f * psi_w, axis=0, keepdims=True) + psi_b                # (1, Ss)
            sigm = jax.nn.sigmoid(psi_f)                                             # (1, Ss)
            # lane-dense upsample of the gating map to the x grid
            sigm_up = jnp.dot(sigm, ips, preferred_element_type=jnp.float32)         # (1, S)

            # gate and w-conv (BatchNorm applied after the batch loop)
            y = sigm_up * x                                                           # (Cin, S)
            wy = jnp.dot(w_w, y, preferred_element_type=jnp.float32) + w_b            # (Cin, S)

            sigm_ref[b] = sigm_up
            wys.append(wy)
            ch_sum = ch_sum + jnp.sum(wy, axis=1, keepdims=True)

        # --- fused BatchNorm2d: train-mode batch stats, biased var, eps=1e-5 ---
        inv_n = 1.0 / float(B * S)
        mean = ch_sum * inv_n                                                         # (Cin, 1)
        ch_sq = jnp.zeros((Cin, 1), jnp.float32)
        for b in range(B):
            d = wys[b] - mean
            ch_sq = ch_sq + jnp.sum(d * d, axis=1, keepdims=True)
        var = ch_sq * inv_n
        scale = gamma * jax.lax.rsqrt(var + 1e-5)
        shift = beta - mean * scale
        for b in range(B):
            wy_ref[b] = wys[b] * scale + shift                                        # (Cin, S)

    return kernel


# ----------------------------------------------------------------------------
# Wrapper: NCHW in, NCHW out (no wrapper transposes of activations).
# ----------------------------------------------------------------------------
def grid_attention_forward(x, g, params):
    B, Cin, H, W = x.shape
    _, Cg, Hg, Wg = g.shape
    kh = kw = 2                                   # sub_sample_factor = 2
    Hs, Ws = H // kh, W // kw
    Ci = params["theta_w"].shape[0]
    Ck = Cin * kh * kw
    S, Ss, Sg = H * W, Hs * Ws, Hg * Wg

    # NCHW is already channel-major; spatial flattening is a free reshape.
    x_flat = x.reshape(B, Cin, S)
    g_flat = g.reshape(B, Cg, Sg)
    # Space-to-depth patches for the 2x2/stride-2 theta conv (channel-major):
    #   xp[b, c*4 + dh*2 + dw, hs*Ws + ws] = x[b, c, 2*hs + dh, 2*ws + dw]
    # (Duplicates x in HBM; negligible here, build in-kernel at scale.)
    xp = x.reshape(B, Cin, Hs, kh, Ws, kw)
    xp = jnp.transpose(xp, (0, 1, 3, 5, 2, 4)).reshape(B, Ck, Ss)

    # Interpolation matrices (transposed for channel-major right-multiply).
    interp_pg_T = jnp.asarray(bilinear_matrix_T((Hs, Ws), (Hg, Wg)))   # (Sg, Ss)
    interp_ps_T = jnp.asarray(bilinear_matrix_T((H, W), (Hs, Ws)))     # (Ss, S)

    # Pack every small weight / bias / BN param into ONE block (single DMA).
    o_theta, o_phi, o_w, o_vec = 0, Ck, Ck + Cg, Ck + Cg + Cin
    n_cols = o_vec + 6
    n_rows = max(Ci, Cin)
    pk = jnp.zeros((n_rows, n_cols), jnp.float32)
    pk = pk.at[:Ci,  o_theta:o_theta + Ck].set(params["theta_w"])
    pk = pk.at[:Ci,  o_phi:o_phi + Cg].set(params["phi_w"])
    pk = pk.at[:Cin, o_w:o_w + Cin].set(params["w_w"])
    pk = pk.at[:Ci,  o_vec + 0].set(params["phi_b"])
    pk = pk.at[:Ci,  o_vec + 1].set(params["psi_w"])
    pk = pk.at[0:1,  o_vec + 2].set(params["psi_b"])
    pk = pk.at[:Cin, o_vec + 3].set(params["w_b"])
    pk = pk.at[:Cin, o_vec + 4].set(params["bn_gamma"])
    pk = pk.at[:Cin, o_vec + 5].set(params["bn_beta"])

    kernel = _make_kernel(B, Cin, Cg, Ci, Ck, S, o_theta, o_phi, o_w, o_vec)

    vmem = pl.BlockSpec(memory_space=pltpu.MemorySpace.VMEM)
    wy_flat, sigm_flat = pl.pallas_call(
        kernel,
        in_specs=[vmem, vmem, vmem, vmem, vmem, vmem],
        out_specs=[vmem, vmem],
        out_shape=[jax.ShapeDtypeStruct((B, Cin, S), jnp.float32),
                   jax.ShapeDtypeStruct((B, 1, S), jnp.float32)],
    )(x_flat, xp, g_flat, pk, interp_pg_T, interp_ps_T)

    # Outputs are already NCHW (flattened spatial) — reshape only.
    wy = wy_flat.reshape(B, Cin, H, W)
    sigm_psi_f = sigm_flat.reshape(B, 1, H, W)
    return wy, sigm_psi_f


# ----------------------------------------------------------------------------
# Deterministic parameter init matching the PyTorch module's init_weights():
# kaiming_normal (fan_in) conv weights, uniform(+-1/sqrt(fan_in)) conv biases,
# BN gamma ~ N(1, 0.02), beta = 0.  Weights are stored in (C_out, C_in_flat)
# channel-major matmul layout (== PyTorch conv weight .reshape(Cout, -1)).
# ----------------------------------------------------------------------------
def init_params(key, in_channels, gating_channels, inter_channels):
    ks = jax.random.split(key, 8)
    Cin, Cg, Ci = in_channels, gating_channels, inter_channels
    kh = kw = 2
    Ck = Cin * kh * kw

    def kaiming(k, shape, fan_in):
        return jax.random.normal(k, shape, jnp.float32) * np.sqrt(2.0 / fan_in)

    return dict(
        theta_w=kaiming(ks[0], (Ci, Ck), Ck),
        phi_w=kaiming(ks[1], (Ci, Cg), Cg),
        phi_b=jax.random.uniform(ks[2], (Ci,), jnp.float32,
                                 -1.0 / np.sqrt(Cg), 1.0 / np.sqrt(Cg)),
        psi_w=kaiming(ks[3], (Ci,), Ci),
        psi_b=jax.random.uniform(ks[4], (1,), jnp.float32,
                                 -1.0 / np.sqrt(Ci), 1.0 / np.sqrt(Ci)),
        w_w=kaiming(ks[5], (Cin, Cin), Cin),
        w_b=jax.random.uniform(ks[6], (Cin,), jnp.float32,
                               -1.0 / np.sqrt(Cin), 1.0 / np.sqrt(Cin)),
        bn_gamma=1.0 + 0.02 * jax.random.normal(ks[7], (Cin,), jnp.float32),
        bn_beta=jnp.zeros((Cin,), jnp.float32),
    )


if __name__ == "__main__":
    key = jax.random.PRNGKey(0)
    kx, kg, kp = jax.random.split(key, 3)

    # Typical U-Net usage: attention in_channels = ublock in_channels // 2,
    # gating_channels = ublock in_channels, gating features at half resolution.
    B, Cin, H, W = 2, 4, 16, 16
    Cg = 2 * Cin                    # gating_channels
    Ci = Cin // 2                   # inter_channels (default in_channels // 2)

    x = jax.random.normal(kx, (B, Cin, H, W), jnp.float32)
    g = jax.random.normal(kg, (B, Cg, H // 2, W // 2), jnp.float32)
    params = init_params(kp, Cin, Cg, Ci)

    wy, sigm_psi_f = grid_attention_forward(x, g, params)
    jax.block_until_ready((wy, sigm_psi_f))

    assert wy.shape == (B, Cin, H, W)
    assert sigm_psi_f.shape == (B, 1, H, W)
    assert bool(jnp.all(jnp.isfinite(wy))) and bool(jnp.all(jnp.isfinite(sigm_psi_f)))
    assert bool(jnp.all(sigm_psi_f >= 0.0)) and bool(jnp.all(sigm_psi_f <= 1.0))
    print("KERNEL_OK")
</pallas_src>

<mosaic_0001>
module attributes {stable_mosaic.version = 11 : i64} {
  func.func @kernel(%arg0: memref<2x4x256xf32, #tpu.memory_space<vmem>>, %arg1: memref<2x16x64xf32, #tpu.memory_space<vmem>>, %arg2: memref<2x8x64xf32, #tpu.memory_space<vmem>>, %arg3: memref<4x34xf32, #tpu.memory_space<vmem>>, %arg4: memref<64x64xf32, #tpu.memory_space<vmem>>, %arg5: memref<64x256xf32, #tpu.memory_space<vmem>>, %arg6: memref<2x4x256xf32, #tpu.memory_space<vmem>>, %arg7: memref<2x1x256xf32, #tpu.memory_space<vmem>>) attributes {dimension_semantics = [], scalar_prefetch = 0 : i64, scratch_operands = 0 : i64, tpu.core_type = #tpu.core_type<tc>} {
    %c0 = arith.constant 0 : index
    %c0_0 = arith.constant 0 : index
    %0 = vector.load %arg3[%c0, %c0_0] : memref<4x34xf32, #tpu.memory_space<vmem>>, vector<4x34xf32>
    %1 = vector.extract_strided_slice %0 {offsets = [0, 0], sizes = [2, 16], strides = [1, 1]} : vector<4x34xf32> to vector<2x16xf32>
    %2 = vector.extract_strided_slice %0 {offsets = [0, 16], sizes = [2, 8], strides = [1, 1]} : vector<4x34xf32> to vector<2x8xf32>
    %3 = vector.extract_strided_slice %0 {offsets = [0, 24], sizes = [4, 4], strides = [1, 1]} : vector<4x34xf32> to vector<4x4xf32>
    %4 = vector.extract_strided_slice %0 {offsets = [0, 28], sizes = [2, 1], strides = [1, 1]} : vector<4x34xf32> to vector<2x1xf32>
    %5 = vector.extract_strided_slice %0 {offsets = [0, 29], sizes = [2, 1], strides = [1, 1]} : vector<4x34xf32> to vector<2x1xf32>
    %6 = vector.extract_strided_slice %0 {offsets = [0, 30], sizes = [1, 1], strides = [1, 1]} : vector<4x34xf32> to vector<1x1xf32>
    %7 = vector.extract_strided_slice %0 {offsets = [0, 31], sizes = [4, 1], strides = [1, 1]} : vector<4x34xf32> to vector<4x1xf32>
    %8 = vector.extract_strided_slice %0 {offsets = [0, 32], sizes = [4, 1], strides = [1, 1]} : vector<4x34xf32> to vector<4x1xf32>
    %9 = vector.extract_strided_slice %0 {offsets = [0, 33], sizes = [4, 1], strides = [1, 1]} : vector<4x34xf32> to vector<4x1xf32>
    %c0_1 = arith.constant 0 : index
    %c0_2 = arith.constant 0 : index
    %10 = vector.load %arg4[%c0_1, %c0_2] : memref<64x64xf32, #tpu.memory_space<vmem>>, vector<64x64xf32>
    %c0_3 = arith.constant 0 : index
    %c0_4 = arith.constant 0 : index
    %11 = vector.load %arg5[%c0_3, %c0_4] : memref<64x256xf32, #tpu.memory_space<vmem>>, vector<64x256xf32>
    %cst = arith.constant 0.000000e+00 : f32
    %12 = vector.broadcast %cst : f32 to vector<4x1xf32>
    %c0_5 = arith.constant 0 : index
    %c0_6 = arith.constant 0 : index
    %c0_7 = arith.constant 0 : index
    %13 = vector.load %arg0[%c0_5, %c0_6, %c0_7] : memref<2x4x256xf32, #tpu.memory_space<vmem>>, vector<1x4x256xf32>
    %14 = vector.shape_cast %13 : vector<1x4x256xf32> to vector<4x256xf32>
    %c0_8 = arith.constant 0 : index
    %c0_9 = arith.constant 0 : index
    %c0_10 = arith.constant 0 : index
    %15 = vector.load %arg1[%c0_8, %c0_9, %c0_10] : memref<2x16x64xf32, #tpu.memory_space<vmem>>, vector<1x16x64xf32>
    %16 = vector.shape_cast %15 : vector<1x16x64xf32> to vector<16x64xf32>
    %c0_11 = arith.constant 0 : index
    %c0_12 = arith.constant 0 : index
    %c0_13 = arith.constant 0 : index
    %17 = vector.load %arg2[%c0_11, %c0_12, %c0_13] : memref<2x8x64xf32, #tpu.memory_space<vmem>>, vector<1x8x64xf32>
    %18 = vector.shape_cast %17 : vector<1x8x64xf32> to vector<8x64xf32>
    %cst_14 = arith.constant dense<0.000000e+00> : vector<2x64xf32>
    %19 = tpu.matmul %1, %16, %cst_14 {dimension_numbers = #tpu.dot_dimension_numbers<[1], [0], [0], [1], [0, 0, 1, 1], [], []>} : vector<2x16xf32>, vector<16x64xf32>, vector<2x64xf32> -> vector<2x64xf32>
    %cst_15 = arith.constant dense<0.000000e+00> : vector<2x64xf32>
    %20 = tpu.matmul %2, %18, %cst_15 {dimension_numbers = #tpu.dot_dimension_numbers<[1], [0], [0], [1], [0, 0, 1, 1], [], []>} : vector<2x8xf32>, vector<8x64xf32>, vector<2x64xf32> -> vector<2x64xf32>
    %21 = vector.broadcast %4 : vector<2x1xf32> to vector<2x64xf32>
    %22 = arith.addf %20, %21 : vector<2x64xf32>
    %cst_16 = arith.constant dense<0.000000e+00> : vector<2x64xf32>
    %23 = tpu.matmul %22, %10, %cst_16 {dimension_numbers = #tpu.dot_dimension_numbers<[1], [0], [0], [1], [0, 0, 1, 1], [], []>} : vector<2x64xf32>, vector<64x64xf32>, vector<2x64xf32> -> vector<2x64xf32>
    %24 = arith.addf %19, %23 : vector<2x64xf32>
    %cst_17 = arith.constant 0.000000e+00 : f32
    %25 = vector.broadcast %cst_17 : f32 to vector<2x64xf32>
    %26 = arith.maximumf %24, %25 : vector<2x64xf32>
    %27 = vector.broadcast %5 : vector<2x1xf32> to vector<2x64xf32>
    %28 = arith.mulf %26, %27 : vector<2x64xf32>
    %cst_18 = arith.constant dense<0.000000e+00> : vector<64xf32>
    %29 = vector.multi_reduction <add>, %28, %cst_18 [0] : vector<2x64xf32> to vector<64xf32>
    %30 = vector.shape_cast %29 : vector<64xf32> to vector<1x64xf32>
    %31 = vector.broadcast %6 : vector<1x1xf32> to vector<1x64xf32>
    %32 = arith.addf %30, %31 : vector<1x64xf32>
    %33 = arith.negf %32 : vector<1x64xf32>
    %34 = math.exp %33 : vector<1x64xf32>
    %cst_19 = arith.constant 1.000000e+00 : f32
    %35 = vector.broadcast %cst_19 : f32 to vector<1x64xf32>
    %36 = arith.addf %35, %34 : vector<1x64xf32>
    %37 = arith.divf %35, %36 : vector<1x64xf32>
    %cst_20 = arith.constant dense<0.000000e+00> : vector<1x256xf32>
    %38 = tpu.matmul %37, %11, %cst_20 {dimension_numbers = #tpu.dot_dimension_numbers<[1], [0], [0], [1], [0, 0, 1, 1], [], []>} : vector<1x64xf32>, vector<64x256xf32>, vector<1x256xf32> -> vector<1x256xf32>
    %39 = vector.broadcast %38 : vector<1x256xf32> to vector<4x256xf32>
    %40 = arith.mulf %39, %14 : vector<4x256xf32>
    %cst_21 = arith.constant dense<0.000000e+00> : vector<4x256xf32>
    %41 = tpu.matmul %3, %40, %cst_21 {dimension_numbers = #tpu.dot_dimension_numbers<[1], [0], [0], [1], [0, 0, 1, 1], [], []>} : vector<4x4xf32>, vector<4x256xf32>, vector<4x256xf32> -> vector<4x256xf32>
    %42 = vector.broadcast %7 : vector<4x1xf32> to vector<4x256xf32>
    %43 = arith.addf %41, %42 : vector<4x256xf32>
    %c0_22 = arith.constant 0 : index
    %c0_23 = arith.constant 0 : index
    %c0_24 = arith.constant 0 : index
    %44 = vector.load %arg7[%c0_22, %c0_23, %c0_24] : memref<2x1x256xf32, #tpu.memory_space<vmem>>, vector<1x1x256xf32>
    %45 = vector.shape_cast %44 : vector<1x1x256xf32> to vector<1x256xf32>
    %46 = vector.shape_cast %38 : vector<1x256xf32> to vector<1x1x256xf32>
    tpu.vector_store %arg7[%c0_22, %c0_23, %c0_24], %46 {strides = array<i32>} : memref<2x1x256xf32, #tpu.memory_space<vmem>>, vector<1x1x256xf32>,
    %cst_25 = arith.constant dense<0.000000e+00> : vector<4xf32>
    %47 = vector.multi_reduction <add>, %43, %cst_25 [1] : vector<4x256xf32> to vector<4xf32>
    %48 = vector.shape_cast %47 : vector<4xf32> to vector<4x1xf32>
    %49 = arith.addf %12, %48 : vector<4x1xf32>
    %c1 = arith.constant 1 : index
    %c0_26 = arith.constant 0 : index
    %c0_27 = arith.constant 0 : index
    %50 = vector.load %arg0[%c1, %c0_26, %c0_27] : memref<2x4x256xf32, #tpu.memory_space<vmem>>, vector<1x4x256xf32>
    %51 = vector.shape_cast %50 : vector<1x4x256xf32> to vector<4x256xf32>
    %c1_28 = arith.constant 1 : index
    %c0_29 = arith.constant 0 : index
    %c0_30 = arith.constant 0 : index
    %52 = vector.load %arg1[%c1_28, %c0_29, %c0_30] : memref<2x16x64xf32, #tpu.memory_space<vmem>>, vector<1x16x64xf32>
    %53 = vector.shape_cast %52 : vector<1x16x64xf32> to vector<16x64xf32>
    %c1_31 = arith.constant 1 : index
    %c0_32 = arith.constant 0 : index
    %c0_33 = arith.constant 0 : index
    %54 = vector.load %arg2[%c1_31, %c0_32, %c0_33] : memref<2x8x64xf32, #tpu.memory_space<vmem>>, vector<1x8x64xf32>
    %55 = vector.shape_cast %54 : vector<1x8x64xf32> to vector<8x64xf32>
    %cst_34 = arith.constant dense<0.000000e+00> : vector<2x64xf32>
    %56 = tpu.matmul %1, %53, %cst_34 {dimension_numbers = #tpu.dot_dimension_numbers<[1], [0], [0], [1], [0, 0, 1, 1], [], []>} : vector<2x16xf32>, vector<16x64xf32>, vector<2x64xf32> -> vector<2x64xf32>
    %cst_35 = arith.constant dense<0.000000e+00> : vector<2x64xf32>
    %57 = tpu.matmul %2, %55, %cst_35 {dimension_numbers = #tpu.dot_dimension_numbers<[1], [0], [0], [1], [0, 0, 1, 1], [], []>} : vector<2x8xf32>, vector<8x64xf32>, vector<2x64xf32> -> vector<2x64xf32>
    %58 = vector.broadcast %4 : vector<2x1xf32> to vector<2x64xf32>
    %59 = arith.addf %57, %58 : vector<2x64xf32>
    %cst_36 = arith.constant dense<0.000000e+00> : vector<2x64xf32>
    %60 = tpu.matmul %59, %10, %cst_36 {dimension_numbers = #tpu.dot_dimension_numbers<[1], [0], [0], [1], [0, 0, 1, 1], [], []>} : vector<2x64xf32>, vector<64x64xf32>, vector<2x64xf32> -> vector<2x64xf32>
    %61 = arith.addf %56, %60 : vector<2x64xf32>
    %cst_37 = arith.constant 0.000000e+00 : f32
    %62 = vector.broadcast %cst_37 : f32 to vector<2x64xf32>
    %63 = arith.maximumf %61, %62 : vector<2x64xf32>
    %64 = vector.broadcast %5 : vector<2x1xf32> to vector<2x64xf32>
    %65 = arith.mulf %63, %64 : vector<2x64xf32>
    %cst_38 = arith.constant dense<0.000000e+00> : vector<64xf32>
    %66 = vector.multi_reduction <add>, %65, %cst_38 [0] : vector<2x64xf32> to vector<64xf32>
    %67 = vector.shape_cast %66 : vector<64xf32> to vector<1x64xf32>
    %68 = vector.broadcast %6 : vector<1x1xf32> to vector<1x64xf32>
    %69 = arith.addf %67, %68 : vector<1x64xf32>
    %70 = arith.negf %69 : vector<1x64xf32>
    %71 = math.exp %70 : vector<1x64xf32>
    %cst_39 = arith.constant 1.000000e+00 : f32
    %72 = vector.broadcast %cst_39 : f32 to vector<1x64xf32>
    %73 = arith.addf %72, %71 : vector<1x64xf32>
    %74 = arith.divf %72, %73 : vector<1x64xf32>
    %cst_40 = arith.constant dense<0.000000e+00> : vector<1x256xf32>
    %75 = tpu.matmul %74, %11, %cst_40 {dimension_numbers = #tpu.dot_dimension_numbers<[1], [0], [0], [1], [0, 0, 1, 1], [], []>} : vector<1x64xf32>, vector<64x256xf32>, vector<1x256xf32> -> vector<1x256xf32>
    %76 = vector.broadcast %75 : vector<1x256xf32> to vector<4x256xf32>
    %77 = arith.mulf %76, %51 : vector<4x256xf32>
    %cst_41 = arith.constant dense<0.000000e+00> : vector<4x256xf32>
    %78 = tpu.matmul %3, %77, %cst_41 {dimension_numbers = #tpu.dot_dimension_numbers<[1], [0], [0], [1], [0, 0, 1, 1], [], []>} : vector<4x4xf32>, vector<4x256xf32>, vector<4x256xf32> -> vector<4x256xf32>
    %79 = vector.broadcast %7 : vector<4x1xf32> to vector<4x256xf32>
    %80 = arith.addf %78, %79 : vector<4x256xf32>
    %c1_42 = arith.constant 1 : index
    %c0_43 = arith.constant 0 : index
    %c0_44 = arith.constant 0 : index
    %81 = vector.load %arg7[%c1_42, %c0_43, %c0_44] : memref<2x1x256xf32, #tpu.memory_space<vmem>>, vector<1x1x256xf32>
    %82 = vector.shape_cast %81 : vector<1x1x256xf32> to vector<1x256xf32>
    %83 = vector.shape_cast %75 : vector<1x256xf32> to vector<1x1x256xf32>
    tpu.vector_store %arg7[%c1_42, %c0_43, %c0_44], %83 {strides = array<i32>} : memref<2x1x256xf32, #tpu.memory_space<vmem>>, vector<1x1x256xf32>,
    %cst_45 = arith.constant dense<0.000000e+00> : vector<4xf32>
    %84 = vector.multi_reduction <add>, %80, %cst_45 [1] : vector<4x256xf32> to vector<4xf32>
    %85 = vector.shape_cast %84 : vector<4xf32> to vector<4x1xf32>
    %86 = arith.addf %49, %85 : vector<4x1xf32>
    %cst_46 = arith.constant 0.001953125 : f32
    %87 = vector.broadcast %cst_46 : f32 to vector<4x1xf32>
    %88 = arith.mulf %86, %87 : vector<4x1xf32>
    %cst_47 = arith.constant 0.000000e+00 : f32
    %89 = vector.broadcast %cst_47 : f32 to vector<4x1xf32>
    %90 = vector.broadcast %88 : vector<4x1xf32> to vector<4x256xf32>
    %91 = arith.subf %43, %90 : vector<4x256xf32>
    %92 = arith.mulf %91, %91 : vector<4x256xf32>
    %cst_48 = arith.constant dense<0.000000e+00> : vector<4xf32>
    %93 = vector.multi_reduction <add>, %92, %cst_48 [1] : vector<4x256xf32> to vector<4xf32>
    %94 = vector.shape_cast %93 : vector<4xf32> to vector<4x1xf32>
    %95 = arith.addf %89, %94 : vector<4x1xf32>
    %96 = vector.broadcast %88 : vector<4x1xf32> to vector<4x256xf32>
    %97 = arith.subf %80, %96 : vector<4x256xf32>
    %98 = arith.mulf %97, %97 : vector<4x256xf32>
    %cst_49 = arith.constant dense<0.000000e+00> : vector<4xf32>
    %99 = vector.multi_reduction <add>, %98, %cst_49 [1] : vector<4x256xf32> to vector<4xf32>
    %100 = vector.shape_cast %99 : vector<4xf32> to vector<4x1xf32>
    %101 = arith.addf %95, %100 : vector<4x1xf32>
    %cst_50 = arith.constant 0.001953125 : f32
    %102 = vector.broadcast %cst_50 : f32 to vector<4x1xf32>
    %103 = arith.mulf %101, %102 : vector<4x1xf32>
    %cst_51 = arith.constant 9.99999974E-6 : f32
    %104 = vector.broadcast %cst_51 : f32 to vector<4x1xf32>
    %105 = arith.addf %103, %104 : vector<4x1xf32>
    %106 = math.rsqrt %105 : vector<4x1xf32>
    %107 = arith.mulf %8, %106 : vector<4x1xf32>
    %108 = arith.mulf %88, %107 : vector<4x1xf32>
    %109 = arith.subf %9, %108 : vector<4x1xf32>
    %110 = vector.broadcast %107 : vector<4x1xf32> to vector<4x256xf32>
    %111 = arith.mulf %43, %110 : vector<4x256xf32>
    %112 = vector.broadcast %109 : vector<4x1xf32> to vector<4x256xf32>
    %113 = arith.addf %111, %112 : vector<4x256xf32>
    %c0_52 = arith.constant 0 : index
    %c0_53 = arith.constant 0 : index
    %c0_54 = arith.constant 0 : index
    %114 = vector.load %arg6[%c0_52, %c0_53, %c0_54] : memref<2x4x256xf32, #tpu.memory_space<vmem>>, vector<1x4x256xf32>
    %115 = vector.shape_cast %114 : vector<1x4x256xf32> to vector<4x256xf32>
    %116 = vector.shape_cast %113 : vector<4x256xf32> to vector<1x4x256xf32>
    tpu.vector_store %arg6[%c0_52, %c0_53, %c0_54], %116 {strides = array<i32>} : memref<2x4x256xf32, #tpu.memory_space<vmem>>, vector<1x4x256xf32>,
    %117 = vector.broadcast %107 : vector<4x1xf32> to vector<4x256xf32>
    %118 = arith.mulf %80, %117 : vector<4x256xf32>
    %119 = vector.broadcast %109 : vector<4x1xf32> to vector<4x256xf32>
    %120 = arith.addf %118, %119 : vector<4x256xf32>
    %c1_55 = arith.constant 1 : index
    %c0_56 = arith.constant 0 : index
    %c0_57 = arith.constant 0 : index
    %121 = vector.load %arg6[%c1_55, %c0_56, %c0_57] : memref<2x4x256xf32, #tpu.memory_space<vmem>>, vector<1x4x256xf32>
    %122 = vector.shape_cast %121 : vector<1x4x256xf32> to vector<4x256xf32>
    %123 = vector.shape_cast %120 : vector<4x256xf32> to vector<1x4x256xf32>
    tpu.vector_store %arg6[%c1_55, %c0_56, %c0_57], %123 {strides = array<i32>} : memref<2x4x256xf32, #tpu.memory_space<vmem>>, vector<1x4x256xf32>,
    return
  }
}

</mosaic_0001>

<llo_original>
// kernel: tpu_custom_call.1
$region0: #{tpu_custom_call.1}
  #allocation0 [shape = 'u32[]', space=smem, size = 0x4, offset = 0x4, fixed_abs, tag = 'smem constant byte address 0x4 - core index']
  #allocation1 [shape = 'u32[144,128]{1,0:T(1,128)}', space=vmem, size = 0x12000, scoped, tag = 'internal scratch']
  %s0 = inlined_call_operand.hbm [shape: f32[2,4,256], index: 0, kind: input, shape index: {}]
  %s1 = inlined_call_operand.hbm [shape: f32[2,16,64], index: 1, kind: input, shape index: {}]
  %s2 = inlined_call_operand.hbm [shape: f32[2,8,64], index: 2, kind: input, shape index: {}]
  %s3 = inlined_call_operand.vmem [shape: f32[4,34], index: 3, kind: input, shape index: {}]
  %s4 = inlined_call_operand.hbm [shape: f32[64,64], index: 4, kind: input, shape index: {}]
  %s5 = inlined_call_operand.hbm [shape: f32[64,256], index: 5, kind: input, shape index: {}]
  %s6 = inlined_call_operand.hbm [shape: f32[2,4,256], index: 6, kind: output, shape index: {0}]
  %s7 = inlined_call_operand.hbm [shape: f32[2,1,256], index: 7, kind: output, shape index: {1}]
  %8 = xla_tuple %s6, %s7
  %s9 = sld [smem:[#allocation0]]
  $region62: #{tpu_custom_call.1} parent=0
    _
  %s11 = ssub.s32 1, %s9
  %s12 = scalar_select 0, %s11, %s9
  $region1: #{tpu_custom_call.1} parent=0
    #allocation2 [shape = 'u8[8192]{0}', space=vmem, size = 0x2000, scoped, tag = 'input window, operand 0, single buffered']
    #allocation3 [shape = 's32[1]{0}', space=sflag, size = 0x4, scoped, tag = 'scoped memory for tpu_custom_call.1']
    #allocation4 [shape = 's32[1]{0}', space=sflag, size = 0x4, scoped, tag = 'scoped memory for tpu_custom_call.1']
    #allocation5 [shape = 'u8[16384]{0}', space=vmem, size = 0x4000, scoped, tag = 'input window, operand 1, single buffered']
    #allocation6 [shape = 's32[1]{0}', space=sflag, size = 0x4, scoped, tag = 'scoped memory for tpu_custom_call.1']
    #allocation7 [shape = 'u8[8192]{0}', space=vmem, size = 0x2000, scoped, tag = 'input window, operand 2, single buffered']
    #allocation8 [shape = 'u8[32768]{0}', space=vmem, size = 0x8000, scoped, tag = 'input window, operand 4, single buffered']
    #allocation9 [shape = 's32[1]{0}', space=sflag, size = 0x4, scoped, tag = 'scoped memory for tpu_custom_call.1']
    #allocation10 [shape = 'u8[65536]{0}', space=vmem, size = 0x10000, scoped, tag = 'input window, operand 5, single buffered']
    #allocation11 [shape = 'u8[8192]{0}', space=vmem, size = 0x2000, scoped, tag = 'output window, operand 0, single buffered']
    #allocation12 [shape = 'u8[2048]{0}', space=vmem, size = 0x800, scoped, tag = 'output window, operand 1, single buffered']
    #allocation13 [shape = 's32[1]{0}', space=sflag, size = 0x4, scoped, tag = 'scoped memory for tpu_custom_call.1']
    %13 = vsyncpa [#allocation3], 0
    %14 = vsyncpa [#allocation6], 0
    %15 = vsyncpa [#allocation9], 0
    %16 = vsyncpa [#allocation4], 0
    %17 = vsyncpa [#allocation13], 0
    // Predicated region
    $region2: #{tpu_custom_call.1} parent=1 // pred_check
      _
    $region3: #{tpu_custom_call.1} parent=1 // pred_check_branch
      %19 = sbr.rel (0) target = $region5
    $region4: #{tpu_custom_call.1} parent=1 // pred_region
      %s21 = ssub.s32 256, 256
      %22 = vsyncadd [#allocation3], %s21
      %s23 = sshll.u32 [#allocation2], 4
      %s24 = int_to_ptr.vmem [resolvable:$true] %s23
      %29 = dma.hbm_to_vmem [thread:$0]  %s0, 256, %s24, [#allocation3], 128, 128, 8
    $region5: #{tpu_custom_call.1} parent=1 // pred_fallthru
      _
    // Predicated region
    $region6: #{tpu_custom_call.1} parent=1 // pred_check
      _
    $region7: #{tpu_custom_call.1} parent=1 // pred_check_branch
      %31 = sbr.rel (0) target = $region9
    $region8: #{tpu_custom_call.1} parent=1 // pred_region
      %s33 = ssub.s32 512, 512
      %34 = vsyncadd [#allocation6], %s33
      %s35 = sshll.u32 [#allocation5], 4
      %s36 = int_to_ptr.vmem [resolvable:$true] %s35
      %41 = dma.hbm_to_vmem [thread:$0]  %s1, 512, %s36, [#allocation6], 128, 128, 8
    $region9: #{tpu_custom_call.1} parent=1 // pred_fallthru
      _
    // Predicated region
    $region10: #{tpu_custom_call.1} parent=1 // pred_check
      _
    $region11: #{tpu_custom_call.1} parent=1 // pred_check_branch
      %43 = sbr.rel (0) target = $region13
    $region12: #{tpu_custom_call.1} parent=1 // pred_region
      %s45 = ssub.s32 256, 256
      %46 = vsyncadd [#allocation6], %s45
      %s47 = sshll.u32 [#allocation7], 4
      %s48 = int_to_ptr.vmem [resolvable:$true] %s47
      %53 = dma.hbm_to_vmem [thread:$0]  %s2, 256, %s48, [#allocation6], 128, 128, 8
    $region13: #{tpu_custom_call.1} parent=1 // pred_fallthru
      _
    // Predicated region
    $region14: #{tpu_custom_call.1} parent=1 // pred_check
      _
    $region15: #{tpu_custom_call.1} parent=1 // pred_check_branch
      %55 = sbr.rel (0) target = $region17
    $region16: #{tpu_custom_call.1} parent=1 // pred_region
      _
    $region17: #{tpu_custom_call.1} parent=1 // pred_fallthru
      _
    // Predicated region
    $region18: #{tpu_custom_call.1} parent=1 // pred_check
      _
    $region19: #{tpu_custom_call.1} parent=1 // pred_check_branch
      %57 = sbr.rel (0) target = $region21
    $region20: #{tpu_custom_call.1} parent=1 // pred_region
      %s59 = ssub.s32 1024, 1024
      %60 = vsyncadd [#allocation9], %s59
      %s61 = sshll.u32 [#allocation8], 4
      %s62 = int_to_ptr.vmem [resolvable:$true] %s61
      %67 = dma.hbm_to_vmem [thread:$0]  %s4, 1024, %s62, [#allocation9], 128, 128, 8
    $region21: #{tpu_custom_call.1} parent=1 // pred_fallthru
      _
    // Predicated region
    $region22: #{tpu_custom_call.1} parent=1 // pred_check
      _
    $region23: #{tpu_custom_call.1} parent=1 // pred_check_branch
      %69 = sbr.rel (0) target = $region25
    $region24: #{tpu_custom_call.1} parent=1 // pred_region
      %s71 = ssub.s32 2048, 2048
      %72 = vsyncadd [#allocation9], %s71
      %s73 = sshll.u32 [#allocation10], 4
      %s74 = int_to_ptr.vmem [resolvable:$true] %s73
      %79 = dma.hbm_to_vmem [thread:$0]  %s5, 2048, %s74, [#allocation9], 256, 256, 16
    $region25: #{tpu_custom_call.1} parent=1 // pred_fallthru
      _
    // Predicated region
    $region26: #{tpu_custom_call.1} parent=1 // pred_check
      _
    $region27: #{tpu_custom_call.1} parent=1 // pred_check_branch
      %81 = sbr.rel (0) target = $region29
    $region28: #{tpu_custom_call.1} parent=1 // pred_region
      %82 = dma.done [#allocation3], 256
    $region29: #{tpu_custom_call.1} parent=1 // pred_fallthru
      _
    // Predicated region
    $region30: #{tpu_custom_call.1} parent=1 // pred_check
      _
    $region31: #{tpu_custom_call.1} parent=1 // pred_check_branch
      %84 = sbr.rel (0) target = $region33
    $region32: #{tpu_custom_call.1} parent=1 // pred_region
      %85 = dma.done [#allocation6], 512
    $region33: #{tpu_custom_call.1} parent=1 // pred_fallthru
      _
    // Predicated region
    $region34: #{tpu_custom_call.1} parent=1 // pred_check
      _
    $region35: #{tpu_custom_call.1} parent=1 // pred_check_branch
      %87 = sbr.rel (0) target = $region37
    $region36: #{tpu_custom_call.1} parent=1 // pred_region
      %88 = dma.done [#allocation6], 256
    $region37: #{tpu_custom_call.1} parent=1 // pred_fallthru
      _
    // Predicated region
    $region38: #{tpu_custom_call.1} parent=1 // pred_check
      _
    $region39: #{tpu_custom_call.1} parent=1 // pred_check_branch
      %90 = sbr.rel (0) target = $region41
    $region40: #{tpu_custom_call.1} parent=1 // pred_region
      %91 = dma.done [#allocation9], 1024
    $region41: #{tpu_custom_call.1} parent=1 // pred_fallthru
      _
    // Predicated region
    $region42: #{tpu_custom_call.1} parent=1 // pred_check
      _
    $region43: #{tpu_custom_call.1} parent=1 // pred_check_branch
      %93 = sbr.rel (0) target = $region45
    $region44: #{tpu_custom_call.1} parent=1 // pred_region
      %94 = dma.done [#allocation9], 2048
    $region45: #{tpu_custom_call.1} parent=1 // pred_fallthru
      _
    %v95 = vld [vmem:[%s3] sm:$0xf]
    %v96 = vld [vmem:[#allocation8] sm:$0xff]
    %v97 = vld [vmem:[#allocation8 + $0x8] sm:$0xff]
    %v98 = vld [vmem:[#allocation8 + $0x10] sm:$0xff]
    %v99 = vld [vmem:[#allocation8 + $0x18] sm:$0xff]
    %v100 = vld [vmem:[#allocation8 + $0x20] sm:$0xff]
    %v101 = vld [vmem:[#allocation8 + $0x28] sm:$0xff]
    %v102 = vld [vmem:[#allocation8 + $0x30] sm:$0xff]
    %v103 = vld [vmem:[#allocation8 + $0x38] sm:$0xff]
    %v104 = vld [vmem:[#allocation10] sm:$0xff]
    %v105 = vld [vmem:[#allocation10 + $0x8] sm:$0xff]
    %v106 = vld [vmem:[#allocation10 + $0x10] sm:$0xff]
    %v107 = vld [vmem:[#allocation10 + $0x18] sm:$0xff]
    %v108 = vld [vmem:[#allocation10 + $0x20] sm:$0xff]
    %v109 = vld [vmem:[#allocation10 + $0x28] sm:$0xff]
    %v110 = vld [vmem:[#allocation10 + $0x30] sm:$0xff]
    %v111 = vld [vmem:[#allocation10 + $0x38] sm:$0xff]
    %v112 = vld [vmem:[#allocation10 + $0x40] sm:$0xff]
    %v113 = vld [vmem:[#allocation10 + $0x48] sm:$0xff]
    %v114 = vld [vmem:[#allocation10 + $0x50] sm:$0xff]
    %v115 = vld [vmem:[#allocation10 + $0x58] sm:$0xff]
    %v116 = vld [vmem:[#allocation10 + $0x60] sm:$0xff]
    %v117 = vld [vmem:[#allocation10 + $0x68] sm:$0xff]
    %v118 = vld [vmem:[#allocation10 + $0x70] sm:$0xff]
    %v119 = vld [vmem:[#allocation10 + $0x78] sm:$0xff]
    %v120 = vld [vmem:[#allocation2] sm:$0xff]
    %v121 = vld [vmem:[#allocation5] sm:$0xff]
    %v122 = vld [vmem:[#allocation5 + $0x8] sm:$0xff]
    %v123 = vld [vmem:[#allocation7] sm:$0xff]
    %125 = vset.pattern.permute.xlu0 28
    %126 = vperm.xlu0 %125, %v95
    %v127 = vpop.permute.xlu0 %126
    %129 = vrot.lane.b32.xlu0 %v95, 112
    %v130 = vpop.permute.xlu0 %129
    %vm131 = vcmask 64512
    %v132 = vsel %vm131, %v130, 0
    %134 = vmatprep.subr.mxu0 0.0
    %135 = vmatpush1.msra.mxu0 %v123
    %136 = vmatprep.subr.mxu0 0.0
    %137 = vmatpush1.msra.mxu0 0.0
    %138 = vmatprep.subr.mxu0 0.0
    %139 = vmatpush1.msra.mxu0 0.0
    %140 = vmatprep.subr.mxu0 0.0
    %141 = vmatpush1.msra.mxu0 0.0
    %142 = vmatprep.subr.mxu0 0.0
    %143 = vmatpush1.msra.mxu0 0.0
    %144 = vmatprep.subr.mxu0 0.0
    %145 = vmatpush1.msra.mxu0 0.0
    %146 = vmatprep.subr.mxu0 0.0
    %147 = vmatpush1.msra.mxu0 0.0
    %148 = vmatprep.subr.mxu0 0.0
    %149 = vmatpush1.msra.mxu0 0.0
    %150 = vmatprep.subr.mxu0 0.0
    %151 = vmatpush1.msra.mxu0 0.0
    %152 = vmatprep.subr.mxu0 0.0
    %153 = vmatpush1.msra.mxu0 0.0
    %154 = vmatprep.subr.mxu0 0.0
    %155 = vmatpush1.msra.mxu0 0.0
    %156 = vmatprep.subr.mxu0 0.0
    %157 = vmatpush1.msra.mxu0 0.0
    %158 = vmatprep.subr.mxu0 0.0
    %159 = vmatpush1.msra.mxu0 0.0
    %160 = vmatprep.subr.mxu0 0.0
    %161 = vmatpush1.msra.mxu0 0.0
    %162 = vmatprep.subr.mxu0 0.0
    %163 = vmatpush1.msra.mxu0 0.0
    %164 = vmatprep.subr.mxu0 0.0
    %165 = vmatpush1.msra.mxu0 0.0
    %166 = vmatprep.subr.mxu0 0.0
    %167 = vmatpush1.msra.mxu0 0.0
    %168 = vmatprep.subr.mxu0 0.0
    %169 = vmatpush1.msra.mxu0 0.0
    %170 = vmatprep.subr.mxu0 0.0
    %171 = vmatpush1.msra.mxu0 0.0
    %172 = vmatprep.subr.mxu0 0.0
    %173 = vmatpush1.msra.mxu0 0.0
    %174 = vmatprep.subr.mxu0 0.0
    %175 = vmatpush1.msra.mxu0 0.0
    %176 = vmatprep.subr.mxu0 0.0
    %177 = vmatpush1.msra.mxu0 0.0
    %178 = vmatprep.subr.mxu0 0.0
    %179 = vmatpush1.msra.mxu0 0.0
    %180 = vmatprep.subr.mxu0 0.0
    %181 = vmatpush1.msra.mxu0 0.0
    %182 = vmatprep.subr.mxu0 0.0
    %183 = vmatpush1.msra.mxu0 0.0
    %184 = vmatprep.subr.mxu0 0.0
    %185 = vmatpush1.msra.mxu0 0.0
    %186 = vmatprep.subr.mxu0 0.0
    %187 = vmatpush1.msra.mxu0 0.0
    %188 = vmatprep.subr.mxu0 0.0
    %189 = vmatpush1.msra.mxu0 0.0
    %190 = vmatprep.subr.mxu0 0.0
    %191 = vmatpush1.msra.mxu0 0.0
    %192 = vmatprep.subr.mxu0 0.0
    %193 = vmatpush1.msra.mxu0 0.0
    %194 = vmatprep.subr.mxu0 0.0
    %195 = vmatpush1.msra.mxu0 0.0
    %196 = vmatprep.subr.mxu0 0.0
    %197 = vmatpush1.msra.mxu0 0.0
    %198 = vmatprep.mubr.f32.mxu0 0.0
    %199 = vmatmul.mubr.f32.gmra.mrb[0].mxu0 %v132
    %v200 = vpop.f32.mrb[0].mxu0
    %v201 = vadd.f32 %v127, %v200
    %v202 = vpop.f32.mrb[0].mxu0
    %203 = vdwg.mxu0
    %vm204 = vcmask 523264
    %v206 = vsel %vm204, %v201, 0
    %208 = vmatprep.subr.mxu0 0.0
    %209 = vmatpush1.msra.mxu0 %v96
    %210 = vmatprep.subr.mxu0 0.0
    %211 = vmatpush1.msra.mxu0 %v97
    %212 = vmatprep.subr.mxu0 0.0
    %213 = vmatpush1.msra.mxu0 %v98
    %214 = vmatprep.subr.mxu0 0.0
    %215 = vmatpush1.msra.mxu0 %v99
    %216 = vmatprep.subr.mxu0 0.0
    %217 = vmatpush1.msra.mxu0 %v100
    %218 = vmatprep.subr.mxu0 0.0
    %219 = vmatpush1.msra.mxu0 %v101
    %220 = vmatprep.subr.mxu0 0.0
    %221 = vmatpush1.msra.mxu0 %v102
    %222 = vmatprep.subr.mxu0 0.0
    %223 = vmatpush1.msra.mxu0 %v103
    %224 = vmatprep.subr.mxu0 0.0
    %225 = vmatpush1.msra.mxu0 0.0
    %226 = vmatprep.subr.mxu0 0.0
    %227 = vmatpush1.msra.mxu0 0.0
    %228 = vmatprep.subr.mxu0 0.0
    %229 = vmatpush1.msra.mxu0 0.0
    %230 = vmatprep.subr.mxu0 0.0
    %231 = vmatpush1.msra.mxu0 0.0
    %232 = vmatprep.subr.mxu0 0.0
    %233 = vmatpush1.msra.mxu0 0.0
    %234 = vmatprep.subr.mxu0 0.0
    %235 = vmatpush1.msra.mxu0 0.0
    %236 = vmatprep.subr.mxu0 0.0
    %237 = vmatpush1.msra.mxu0 0.0
    %238 = vmatprep.subr.mxu0 0.0
    %239 = vmatpush1.msra.mxu0 0.0
    %240 = vmatprep.subr.mxu0 0.0
    %241 = vmatpush1.msra.mxu0 0.0
    %242 = vmatprep.subr.mxu0 0.0
    %243 = vmatpush1.msra.mxu0 0.0
    %244 = vmatprep.subr.mxu0 0.0
    %245 = vmatpush1.msra.mxu0 0.0
    %246 = vmatprep.subr.mxu0 0.0
    %247 = vmatpush1.msra.mxu0 0.0
    %248 = vmatprep.subr.mxu0 0.0
    %249 = vmatpush1.msra.mxu0 0.0
    %250 = vmatprep.subr.mxu0 0.0
    %251 = vmatpush1.msra.mxu0 0.0
    %252 = vmatprep.subr.mxu0 0.0
    %253 = vmatpush1.msra.mxu0 0.0
    %254 = vmatprep.subr.mxu0 0.0
    %255 = vmatpush1.msra.mxu0 0.0
    %256 = vmatprep.subr.mxu0 0.0
    %257 = vmatpush1.msra.mxu0 0.0
    %258 = vmatprep.subr.mxu0 0.0
    %259 = vmatpush1.msra.mxu0 0.0
    %260 = vmatprep.subr.mxu0 0.0
    %261 = vmatpush1.msra.mxu0 0.0
    %262 = vmatprep.subr.mxu0 0.0
    %263 = vmatpush1.msra.mxu0 0.0
    %264 = vmatprep.subr.mxu0 0.0
    %265 = vmatpush1.msra.mxu0 0.0
    %266 = vmatprep.subr.mxu0 0.0
    %267 = vmatpush1.msra.mxu0 0.0
    %268 = vmatprep.subr.mxu0 0.0
    %269 = vmatpush1.msra.mxu0 0.0
    %270 = vmatprep.subr.mxu0 0.0
    %271 = vmatpush1.msra.mxu0 0.0
    %272 = vmatprep.mubr.f32.mxu0 0.0
    %273 = vmatmul.mubr.f32.gmra.mrb[0].mxu0 %v206
    %v274 = vpop.f32.mrb[0].mxu0
    %v275 = vadd.f32 0.0, %v274
    %v276 = vpop.f32.mrb[0].mxu0
    %277 = vdwg.mxu0
    %vm278 = vcmask 130048
    %v279 = vsel %vm278, %v95, 0
    %281 = vmatprep.subr.mxu0 0.0
    %282 = vmatpush1.msra.mxu0 %v121
    %283 = vmatprep.subr.mxu0 0.0
    %284 = vmatpush1.msra.mxu0 %v122
    %285 = vmatprep.subr.mxu0 0.0
    %286 = vmatpush1.msra.mxu0 0.0
    %287 = vmatprep.subr.mxu0 0.0
    %288 = vmatpush1.msra.mxu0 0.0
    %289 = vmatprep.subr.mxu0 0.0
    %290 = vmatpush1.msra.mxu0 0.0
    %291 = vmatprep.subr.mxu0 0.0
    %292 = vmatpush1.msra.mxu0 0.0
    %293 = vmatprep.subr.mxu0 0.0
    %294 = vmatpush1.msra.mxu0 0.0
    %295 = vmatprep.subr.mxu0 0.0
    %296 = vmatpush1.msra.mxu0 0.0
    %297 = vmatprep.subr.mxu0 0.0
    %298 = vmatpush1.msra.mxu0 0.0
    %299 = vmatprep.subr.mxu0 0.0
    %300 = vmatpush1.msra.mxu0 0.0
    %301 = vmatprep.subr.mxu0 0.0
    %302 = vmatpush1.msra.mxu0 0.0
    %303 = vmatprep.subr.mxu0 0.0
    %304 = vmatpush1.msra.mxu0 0.0
    %305 = vmatprep.subr.mxu0 0.0
    %306 = vmatpush1.msra.mxu0 0.0
    %307 = vmatprep.subr.mxu0 0.0
    %308 = vmatpush1.msra.mxu0 0.0
    %309 = vmatprep.subr.mxu0 0.0
    %310 = vmatpush1.msra.mxu0 0.0
    %311 = vmatprep.subr.mxu0 0.0
    %312 = vmatpush1.msra.mxu0 0.0
    %313 = vmatprep.subr.mxu0 0.0
    %314 = vmatpush1.msra.mxu0 0.0
    %315 = vmatprep.subr.mxu0 0.0
    %316 = vmatpush1.msra.mxu0 0.0
    %317 = vmatprep.subr.mxu0 0.0
    %318 = vmatpush1.msra.mxu0 0.0
    %319 = vmatprep.subr.mxu0 0.0
    %320 = vmatpush1.msra.mxu0 0.0
    %321 = vmatprep.subr.mxu0 0.0
    %322 = vmatpush1.msra.mxu0 0.0
    %323 = vmatprep.subr.mxu0 0.0
    %324 = vmatpush1.msra.mxu0 0.0
    %325 = vmatprep.subr.mxu0 0.0
    %326 = vmatpush1.msra.mxu0 0.0
    %327 = vmatprep.subr.mxu0 0.0
    %328 = vmatpush1.msra.mxu0 0.0
    %329 = vmatprep.subr.mxu0 0.0
    %330 = vmatpush1.msra.mxu0 0.0
    %331 = vmatprep.subr.mxu0 0.0
    %332 = vmatpush1.msra.mxu0 0.0
    %333 = vmatprep.subr.mxu0 0.0
    %334 = vmatpush1.msra.mxu0 0.0
    %335 = vmatprep.subr.mxu0 0.0
    %336 = vmatpush1.msra.mxu0 0.0
    %337 = vmatprep.subr.mxu0 0.0
    %338 = vmatpush1.msra.mxu0 0.0
    %339 = vmatprep.subr.mxu0 0.0
    %340 = vmatpush1.msra.mxu0 0.0
    %341 = vmatprep.subr.mxu0 0.0
    %342 = vmatpush1.msra.mxu0 0.0
    %343 = vmatprep.subr.mxu0 0.0
    %344 = vmatpush1.msra.mxu0 0.0
    %345 = vmatprep.mubr.f32.mxu0 0.0
    %346 = vmatmul.mubr.f32.gmra.mrb[0].mxu0 %v279
    %v347 = vpop.f32.mrb[0].mxu0
    %v348 = vadd.f32 %v275, %v347
    %v349 = vpop.f32.mrb[0].mxu0
    %350 = vdwg.mxu0
    %v351 = vmax.f32 %v348, 0.0
    %352 = vset.pattern.permute.xlu0 29
    %353 = vperm.xlu0 %352, %v95
    %v354 = vpop.permute.xlu0 %353
    %v356 = vmul.f32 %v351, %v354
    %vm357 = vcmask 517120
    %v358 = vsel %vm357, %v356, 0.0
    %v359 = vrot.slane %v358, 4
    %v360 = vadd.f32 %v358, %v359
    %v361 = vrot.slane %v360, 2
    %v362 = vadd.f32 %v360, %v361
    %v363 = vrot.slane %v362, 1
    %v364 = vadd.f32 %v362, %v363
    %365 = vset.pattern.permute.xlu0 30
    %366 = vperm.xlu0 %365, %v95
    %v367 = vpop.permute.xlu0 %366
    %v369 = vadd.f32 %v364, %v367
    %v370 = vxor.u32 %v369, 2147483648
    %v371 = vmul.f32 %v370, 1.442695
    %v372 = vpow.pop %v371
    %v373 = vadd.f32 %v372, 1.0
    %v374 = vrcp.pop %v373
    %v375 = vmul.f32 1.0, %v374
    %v377 = vsel %vm204, %v375, 0
    %379 = vmatprep.subr.mxu0 %v105
    %380 = vmatpush1.msra.mxu0 %v104
    %381 = vmatprep.subr.mxu0 %v107
    %382 = vmatpush1.msra.mxu0 %v106
    %383 = vmatprep.subr.mxu0 %v109
    %384 = vmatpush1.msra.mxu0 %v108
    %385 = vmatprep.subr.mxu0 %v111
    %386 = vmatpush1.msra.mxu0 %v110
    %387 = vmatprep.subr.mxu0 %v113
    %388 = vmatpush1.msra.mxu0 %v112
    %389 = vmatprep.subr.mxu0 %v115
    %390 = vmatpush1.msra.mxu0 %v114
    %391 = vmatprep.subr.mxu0 %v117
    %392 = vmatpush1.msra.mxu0 %v116
    %393 = vmatprep.subr.mxu0 %v119
    %394 = vmatpush1.msra.mxu0 %v118
    %395 = vmatprep.subr.mxu0 0.0
    %396 = vmatpush1.msra.mxu0 0.0
    %397 = vmatprep.subr.mxu0 0.0
    %398 = vmatpush1.msra.mxu0 0.0
    %399 = vmatprep.subr.mxu0 0.0
    %400 = vmatpush1.msra.mxu0 0.0
    %401 = vmatprep.subr.mxu0 0.0
    %402 = vmatpush1.msra.mxu0 0.0
    %403 = vmatprep.subr.mxu0 0.0
    %404 = vmatpush1.msra.mxu0 0.0
    %405 = vmatprep.subr.mxu0 0.0
    %406 = vmatpush1.msra.mxu0 0.0
    %407 = vmatprep.subr.mxu0 0.0
    %408 = vmatpush1.msra.mxu0 0.0
    %409 = vmatprep.subr.mxu0 0.0
    %410 = vmatpush1.msra.mxu0 0.0
    %411 = vmatprep.subr.mxu0 0.0
    %412 = vmatpush1.msra.mxu0 0.0
    %413 = vmatprep.subr.mxu0 0.0
    %414 = vmatpush1.msra.mxu0 0.0
    %415 = vmatprep.subr.mxu0 0.0
    %416 = vmatpush1.msra.mxu0 0.0
    %417 = vmatprep.subr.mxu0 0.0
    %418 = vmatpush1.msra.mxu0 0.0
    %419 = vmatprep.subr.mxu0 0.0
    %420 = vmatpush1.msra.mxu0 0.0
    %421 = vmatprep.subr.mxu0 0.0
    %422 = vmatpush1.msra.mxu0 0.0
    %423 = vmatprep.subr.mxu0 0.0
    %424 = vmatpush1.msra.mxu0 0.0
    %425 = vmatprep.subr.mxu0 0.0
    %426 = vmatpush1.msra.mxu0 0.0
    %427 = vmatprep.subr.mxu0 0.0
    %428 = vmatpush1.msra.mxu0 0.0
    %429 = vmatprep.subr.mxu0 0.0
    %430 = vmatpush1.msra.mxu0 0.0
    %431 = vmatprep.subr.mxu0 0.0
    %432 = vmatpush1.msra.mxu0 0.0
    %433 = vmatprep.subr.mxu0 0.0
    %434 = vmatpush1.msra.mxu0 0.0
    %435 = vmatprep.subr.mxu0 0.0
    %436 = vmatpush1.msra.mxu0 0.0
    %437 = vmatprep.subr.mxu0 0.0
    %438 = vmatpush1.msra.mxu0 0.0
    %439 = vmatprep.subr.mxu0 0.0
    %440 = vmatpush1.msra.mxu0 0.0
    %441 = vmatprep.subr.mxu0 0.0
    %442 = vmatpush1.msra.mxu0 0.0
    %443 = vmatprep.mubr.f32.mxu0 0.0
    %444 = vmatmul.mubr.f32.gmra.mrb[0].mxu0 %v377
    %v445 = vpop.f32.mrb[0].mxu0
    %v446 = vadd.f32 0.0, %v445
    %v447 = vpop.f32.mrb[0].mxu0
    %v448 = vadd.f32 0.0, %v447
    %449 = vdwg.mxu0
    %v450 = vlaneseq
    %v451 = vshrl.u32 %v450, 7
    %v452 = vsub.s32 0, %v451
    %v453 = vrot.slane %v446, %v452
    %v454 = vlaneseq
    %v455 = vshrl.u32 %v454, 7
    %v456 = vsub.s32 0, %v455
    %v457 = vrot.slane %v448, %v456
    %v459 = vcombine.high %v120, %v120
    %v461 = vmul.f32 %v453, %v120
    %v462 = vmul.f32 %v457, %v459
    %463 = vset.pattern.permute.xlu0 31
    %464 = vperm.xlu0 %463, %v95
    %v465 = vpop.permute.xlu0 %464
    %467 = vrot.lane.b32.xlu0 %v95, 104
    %v468 = vpop.permute.xlu0 %467
    %vm469 = vcmask 31744
    %v470 = vsel %vm469, %v468, 0
    %vm472 = vcmask 1043456
    %v474 = vsel %vm472, %v461, 0
    %v477 = vsel %vm472, %v462, 0
    %479 = vmatprep.subr.mxu0 %v477
    %480 = vmatpush1.msra.mxu0 %v474
    %481 = vmatprep.subr.mxu0 0.0
    %482 = vmatpush1.msra.mxu0 0.0
    %483 = vmatprep.subr.mxu0 0.0
    %484 = vmatpush1.msra.mxu0 0.0
    %485 = vmatprep.subr.mxu0 0.0
    %486 = vmatpush1.msra.mxu0 0.0
    %487 = vmatprep.subr.mxu0 0.0
    %488 = vmatpush1.msra.mxu0 0.0
    %489 = vmatprep.subr.mxu0 0.0
    %490 = vmatpush1.msra.mxu0 0.0
    %491 = vmatprep.subr.mxu0 0.0
    %492 = vmatpush1.msra.mxu0 0.0
    %493 = vmatprep.subr.mxu0 0.0
    %494 = vmatpush1.msra.mxu0 0.0
    %495 = vmatprep.subr.mxu0 0.0
    %496 = vmatpush1.msra.mxu0 0.0
    %497 = vmatprep.subr.mxu0 0.0
    %498 = vmatpush1.msra.mxu0 0.0
    %499 = vmatprep.subr.mxu0 0.0
    %500 = vmatpush1.msra.mxu0 0.0
    %501 = vmatprep.subr.mxu0 0.0
    %502 = vmatpush1.msra.mxu0 0.0
    %503 = vmatprep.subr.mxu0 0.0
    %504 = vmatpush1.msra.mxu0 0.0
    %505 = vmatprep.subr.mxu0 0.0
    %506 = vmatpush1.msra.mxu0 0.0
    %507 = vmatprep.subr.mxu0 0.0
    %508 = vmatpush1.msra.mxu0 0.0
    %509 = vmatprep.subr.mxu0 0.0
    %510 = vmatpush1.msra.mxu0 0.0
    %511 = vmatprep.subr.mxu0 0.0
    %512 = vmatpush1.msra.mxu0 0.0
    %513 = vmatprep.subr.mxu0 0.0
    %514 = vmatpush1.msra.mxu0 0.0
    %515 = vmatprep.subr.mxu0 0.0
    %516 = vmatpush1.msra.mxu0 0.0
    %517 = vmatprep.subr.mxu0 0.0
    %518 = vmatpush1.msra.mxu0 0.0
    %519 = vmatprep.subr.mxu0 0.0
    %520 = vmatpush1.msra.mxu0 0.0
    %521 = vmatprep.subr.mxu0 0.0
    %522 = vmatpush1.msra.mxu0 0.0
    %523 = vmatprep.subr.mxu0 0.0
    %524 = vmatpush1.msra.mxu0 0.0
    %525 = vmatprep.subr.mxu0 0.0
    %526 = vmatpush1.msra.mxu0 0.0
    %527 = vmatprep.subr.mxu0 0.0
    %528 = vmatpush1.msra.mxu0 0.0
    %529 = vmatprep.subr.mxu0 0.0
    %530 = vmatpush1.msra.mxu0 0.0
    %531 = vmatprep.subr.mxu0 0.0
    %532 = vmatpush1.msra.mxu0 0.0
    %533 = vmatprep.subr.mxu0 0.0
    %534 = vmatpush1.msra.mxu0 0.0
    %535 = vmatprep.subr.mxu0 0.0
    %536 = vmatpush1.msra.mxu0 0.0
    %537 = vmatprep.subr.mxu0 0.0
    %538 = vmatpush1.msra.mxu0 0.0
    %539 = vmatprep.subr.mxu0 0.0
    %540 = vmatpush1.msra.mxu0 0.0
    %541 = vmatprep.subr.mxu0 0.0
    %542 = vmatpush1.msra.mxu0 0.0
    %543 = vmatprep.mubr.f32.mxu0 0.0
    %544 = vmatmul.mubr.f32.gmra.mrb[0].mxu0 %v470
    %v545 = vpop.f32.mrb[0].mxu0
    %v546 = vadd.f32 %v465, %v545
    %v547 = vpop.f32.mrb[0].mxu0
    %v548 = vadd.f32 %v465, %v547
    %549 = vdwg.mxu0
    %v552 = vcombine.low %v446, %v448
    %v554 = vunpack.c.l.s4 1966171168
    %v555 = vunpack.c.0.s8 %v554
    %v556 = vlaneseq
    %v557 = vshrl.u32 %v556, 7
    %v558 = vsub.s32 %v555, %v557
    %v559 = vrot.slane %v552, %v558
    %v561 = vunpack.c.l.s4 1966171168
    %v562 = vunpack.c.0.s8 %v561
    %v563 = vlaneseq
    %v564 = vshrl.u32 %v563, 7
    %v565 = vsub.s32 %v562, %v564
    %v566 = vrot.slane %v559, %v565
    %v568 = vlaneseq
    %vm569 = vcmp.ge.s32.totalorder %v568, 0
    %vm570 = vcmp.lt.s32.totalorder %v568, 256
    %vm571 = vmand %vm569, %vm570
    %572 = vst.msk [vmem:[#allocation12] sm:$0x3] %vm571, %v566
    %v573 = vsel %vm472, %v546, 0.0
    %v574 = vsel %vm472, %v548, 0.0
    %v575 = vadd.f32 %v573, %v574
    %576 = vadd.xlane.f32.xlu0 %v575
    %v577 = vpop.xlane.xlu0 %576
    %v578 = vadd.f32 %v577, 0.0
    %s579 = scalar_lea.vmem [#allocation2], 8
    %v580 = vld [vmem:[%s579] sm:$0xff]
    %s581 = scalar_lea.vmem [#allocation5], 16
    %v582 = vld [vmem:[%s581] sm:$0xff]
    %v583 = vld [vmem:[%s581 + $0x8] sm:$0xff]
    %s584 = scalar_lea.vmem [#allocation7], 8
    %v585 = vld [vmem:[%s584] sm:$0xff]
    %586 = vmatprep.subr.mxu0 0.0
    %587 = vmatpush1.msra.mxu0 %v585
    %588 = vmatprep.subr.mxu0 0.0
    %589 = vmatpush1.msra.mxu0 0.0
    %590 = vmatprep.subr.mxu0 0.0
    %591 = vmatpush1.msra.mxu0 0.0
    %592 = vmatprep.subr.mxu0 0.0
    %593 = vmatpush1.msra.mxu0 0.0
    %594 = vmatprep.subr.mxu0 0.0
    %595 = vmatpush1.msra.mxu0 0.0
    %596 = vmatprep.subr.mxu0 0.0
    %597 = vmatpush1.msra.mxu0 0.0
    %598 = vmatprep.subr.mxu0 0.0
    %599 = vmatpush1.msra.mxu0 0.0
    %600 = vmatprep.subr.mxu0 0.0
    %601 = vmatpush1.msra.mxu0 0.0
    %602 = vmatprep.subr.mxu0 0.0
    %603 = vmatpush1.msra.mxu0 0.0
    %604 = vmatprep.subr.mxu0 0.0
    %605 = vmatpush1.msra.mxu0 0.0
    %606 = vmatprep.subr.mxu0 0.0
    %607 = vmatpush1.msra.mxu0 0.0
    %608 = vmatprep.subr.mxu0 0.0
    %609 = vmatpush1.msra.mxu0 0.0
    %610 = vmatprep.subr.mxu0 0.0
    %611 = vmatpush1.msra.mxu0 0.0
    %612 = vmatprep.subr.mxu0 0.0
    %613 = vmatpush1.msra.mxu0 0.0
    %614 = vmatprep.subr.mxu0 0.0
    %615 = vmatpush1.msra.mxu0 0.0
    %616 = vmatprep.subr.mxu0 0.0
    %617 = vmatpush1.msra.mxu0 0.0
    %618 = vmatprep.subr.mxu0 0.0
    %619 = vmatpush1.msra.mxu0 0.0
    %620 = vmatprep.subr.mxu0 0.0
    %621 = vmatpush1.msra.mxu0 0.0
    %622 = vmatprep.subr.mxu0 0.0
    %623 = vmatpush1.msra.mxu0 0.0
    %624 = vmatprep.subr.mxu0 0.0
    %625 = vmatpush1.msra.mxu0 0.0
    %626 = vmatprep.subr.mxu0 0.0
    %627 = vmatpush1.msra.mxu0 0.0
    %628 = vmatprep.subr.mxu0 0.0
    %629 = vmatpush1.msra.mxu0 0.0
    %630 = vmatprep.subr.mxu0 0.0
    %631 = vmatpush1.msra.mxu0 0.0
    %632 = vmatprep.subr.mxu0 0.0
    %633 = vmatpush1.msra.mxu0 0.0
    %634 = vmatprep.subr.mxu0 0.0
    %635 = vmatpush1.msra.mxu0 0.0
    %636 = vmatprep.subr.mxu0 0.0
    %637 = vmatpush1.msra.mxu0 0.0
    %638 = vmatprep.subr.mxu0 0.0
    %639 = vmatpush1.msra.mxu0 0.0
    %640 = vmatprep.subr.mxu0 0.0
    %641 = vmatpush1.msra.mxu0 0.0
    %642 = vmatprep.subr.mxu0 0.0
    %643 = vmatpush1.msra.mxu0 0.0
    %644 = vmatprep.subr.mxu0 0.0
    %645 = vmatpush1.msra.mxu0 0.0
    %646 = vmatprep.subr.mxu0 0.0
    %647 = vmatpush1.msra.mxu0 0.0
    %648 = vmatprep.subr.mxu0 0.0
    %649 = vmatpush1.msra.mxu0 0.0
    %650 = vmatprep.mubr.f32.mxu0 0.0
    %651 = vmatmul.mubr.f32.gmra.mrb[0].mxu0 %v132
    %v652 = vpop.f32.mrb[0].mxu0
    %v653 = vadd.f32 %v127, %v652
    %v654 = vpop.f32.mrb[0].mxu0
    %655 = vdwg.mxu0
    %v657 = vsel %vm204, %v653, 0
    %659 = vmatprep.subr.mxu0 0.0
    %660 = vmatpush1.msra.mxu0 %v96
    %661 = vmatprep.subr.mxu0 0.0
    %662 = vmatpush1.msra.mxu0 %v97
    %663 = vmatprep.subr.mxu0 0.0
    %664 = vmatpush1.msra.mxu0 %v98
    %665 = vmatprep.subr.mxu0 0.0
    %666 = vmatpush1.msra.mxu0 %v99
    %667 = vmatprep.subr.mxu0 0.0
    %668 = vmatpush1.msra.mxu0 %v100
    %669 = vmatprep.subr.mxu0 0.0
    %670 = vmatpush1.msra.mxu0 %v101
    %671 = vmatprep.subr.mxu0 0.0
    %672 = vmatpush1.msra.mxu0 %v102
    %673 = vmatprep.subr.mxu0 0.0
    %674 = vmatpush1.msra.mxu0 %v103
    %675 = vmatprep.subr.mxu0 0.0
    %676 = vmatpush1.msra.mxu0 0.0
    %677 = vmatprep.subr.mxu0 0.0
    %678 = vmatpush1.msra.mxu0 0.0
    %679 = vmatprep.subr.mxu0 0.0
    %680 = vmatpush1.msra.mxu0 0.0
    %681 = vmatprep.subr.mxu0 0.0
    %682 = vmatpush1.msra.mxu0 0.0
    %683 = vmatprep.subr.mxu0 0.0
    %684 = vmatpush1.msra.mxu0 0.0
    %685 = vmatprep.subr.mxu0 0.0
    %686 = vmatpush1.msra.mxu0 0.0
    %687 = vmatprep.subr.mxu0 0.0
    %688 = vmatpush1.msra.mxu0 0.0
    %689 = vmatprep.subr.mxu0 0.0
    %690 = vmatpush1.msra.mxu0 0.0
    %691 = vmatprep.subr.mxu0 0.0
    %692 = vmatpush1.msra.mxu0 0.0
    %693 = vmatprep.subr.mxu0 0.0
    %694 = vmatpush1.msra.mxu0 0.0
    %695 = vmatprep.subr.mxu0 0.0
    %696 = vmatpush1.msra.mxu0 0.0
    %697 = vmatprep.subr.mxu0 0.0
    %698 = vmatpush1.msra.mxu0 0.0
    %699 = vmatprep.subr.mxu0 0.0
    %700 = vmatpush1.msra.mxu0 0.0
    %701 = vmatprep.subr.mxu0 0.0
    %702 = vmatpush1.msra.mxu0 0.0
    %703 = vmatprep.subr.mxu0 0.0
    %704 = vmatpush1.msra.mxu0 0.0
    %705 = vmatprep.subr.mxu0 0.0
    %706 = vmatpush1.msra.mxu0 0.0
    %707 = vmatprep.subr.mxu0 0.0
    %708 = vmatpush1.msra.mxu0 0.0
    %709 = vmatprep.subr.mxu0 0.0
    %710 = vmatpush1.msra.mxu0 0.0
    %711 = vmatprep.subr.mxu0 0.0
    %712 = vmatpush1.msra.mxu0 0.0
    %713 = vmatprep.subr.mxu0 0.0
    %714 = vmatpush1.msra.mxu0 0.0
    %715 = vmatprep.subr.mxu0 0.0
    %716 = vmatpush1.msra.mxu0 0.0
    %717 = vmatprep.subr.mxu0 0.0
    %718 = vmatpush1.msra.mxu0 0.0
    %719 = vmatprep.subr.mxu0 0.0
    %720 = vmatpush1.msra.mxu0 0.0
    %721 = vmatprep.subr.mxu0 0.0
    %722 = vmatpush1.msra.mxu0 0.0
    %723 = vmatprep.mubr.f32.mxu0 0.0
    %724 = vmatmul.mubr.f32.gmra.mrb[0].mxu0 %v657
    %v725 = vpop.f32.mrb[0].mxu0
    %v726 = vadd.f32 0.0, %v725
    %v727 = vpop.f32.mrb[0].mxu0
    %728 = vdwg.mxu0
    %729 = vmatprep.subr.mxu0 0.0
    %730 = vmatpush1.msra.mxu0 %v582
    %731 = vmatprep.subr.mxu0 0.0
    %732 = vmatpush1.msra.mxu0 %v583
    %733 = vmatprep.subr.mxu0 0.0
    %734 = vmatpush1.msra.mxu0 0.0
    %735 = vmatprep.subr.mxu0 0.0
    %736 = vmatpush1.msra.mxu0 0.0
    %737 = vmatprep.subr.mxu0 0.0
    %738 = vmatpush1.msra.mxu0 0.0
    %739 = vmatprep.subr.mxu0 0.0
    %740 = vmatpush1.msra.mxu0 0.0
    %741 = vmatprep.subr.mxu0 0.0
    %742 = vmatpush1.msra.mxu0 0.0
    %743 = vmatprep.subr.mxu0 0.0
    %744 = vmatpush1.msra.mxu0 0.0
    %745 = vmatprep.subr.mxu0 0.0
    %746 = vmatpush1.msra.mxu0 0.0
    %747 = vmatprep.subr.mxu0 0.0
    %748 = vmatpush1.msra.mxu0 0.0
    %749 = vmatprep.subr.mxu0 0.0
    %750 = vmatpush1.msra.mxu0 0.0
    %751 = vmatprep.subr.mxu0 0.0
    %752 = vmatpush1.msra.mxu0 0.0
    %753 = vmatprep.subr.mxu0 0.0
    %754 = vmatpush1.msra.mxu0 0.0
    %755 = vmatprep.subr.mxu0 0.0
    %756 = vmatpush1.msra.mxu0 0.0
    %757 = vmatprep.subr.mxu0 0.0
    %758 = vmatpush1.msra.mxu0 0.0
    %759 = vmatprep.subr.mxu0 0.0
    %760 = vmatpush1.msra.mxu0 0.0
    %761 = vmatprep.subr.mxu0 0.0
    %762 = vmatpush1.msra.mxu0 0.0
    %763 = vmatprep.subr.mxu0 0.0
    %764 = vmatpush1.msra.mxu0 0.0
    %765 = vmatprep.subr.mxu0 0.0
    %766 = vmatpush1.msra.mxu0 0.0
    %767 = vmatprep.subr.mxu0 0.0
    %768 = vmatpush1.msra.mxu0 0.0
    %769 = vmatprep.subr.mxu0 0.0
    %770 = vmatpush1.msra.mxu0 0.0
    %771 = vmatprep.subr.mxu0 0.0
    %772 = vmatpush1.msra.mxu0 0.0
    %773 = vmatprep.subr.mxu0 0.0
    %774 = vmatpush1.msra.mxu0 0.0
    %775 = vmatprep.subr.mxu0 0.0
    %776 = vmatpush1.msra.mxu0 0.0
    %777 = vmatprep.subr.mxu0 0.0
    %778 = vmatpush1.msra.mxu0 0.0
    %779 = vmatprep.subr.mxu0 0.0
    %780 = vmatpush1.msra.mxu0 0.0
    %781 = vmatprep.subr.mxu0 0.0
    %782 = vmatpush1.msra.mxu0 0.0
    %783 = vmatprep.subr.mxu0 0.0
    %784 = vmatpush1.msra.mxu0 0.0
    %785 = vmatprep.subr.mxu0 0.0
    %786 = vmatpush1.msra.mxu0 0.0
    %787 = vmatprep.subr.mxu0 0.0
    %788 = vmatpush1.msra.mxu0 0.0
    %789 = vmatprep.subr.mxu0 0.0
    %790 = vmatpush1.msra.mxu0 0.0
    %791 = vmatprep.subr.mxu0 0.0
    %792 = vmatpush1.msra.mxu0 0.0
    %793 = vmatprep.mubr.f32.mxu0 0.0
    %794 = vmatmul.mubr.f32.gmra.mrb[0].mxu0 %v279
    %v795 = vpop.f32.mrb[0].mxu0
    %v796 = vadd.f32 %v726, %v795
    %v797 = vpop.f32.mrb[0].mxu0
    %798 = vdwg.mxu0
    %v799 = vmax.f32 %v796, 0.0
    %v800 = vmul.f32 %v799, %v354
    %v801 = vsel %vm357, %v800, 0.0
    %v802 = vrot.slane %v801, 4
    %v803 = vadd.f32 %v801, %v802
    %v804 = vrot.slane %v803, 2
    %v805 = vadd.f32 %v803, %v804
    %v806 = vrot.slane %v805, 1
    %v807 = vadd.f32 %v805, %v806
    %v808 = vadd.f32 %v807, %v367
    %v809 = vxor.u32 %v808, 2147483648
    %v810 = vmul.f32 %v809, 1.442695
    %v811 = vpow.pop %v810
    %v812 = vadd.f32 %v811, 1.0
    %v813 = vrcp.pop %v812
    %v814 = vmul.f32 1.0, %v813
    %v816 = vsel %vm204, %v814, 0
    %818 = vmatprep.subr.mxu0 %v105
    %819 = vmatpush1.msra.mxu0 %v104
    %820 = vmatprep.subr.mxu0 %v107
    %821 = vmatpush1.msra.mxu0 %v106
    %822 = vmatprep.subr.mxu0 %v109
    %823 = vmatpush1.msra.mxu0 %v108
    %824 = vmatprep.subr.mxu0 %v111
    %825 = vmatpush1.msra.mxu0 %v110
    %826 = vmatprep.subr.mxu0 %v113
    %827 = vmatpush1.msra.mxu0 %v112
    %828 = vmatprep.subr.mxu0 %v115
    %829 = vmatpush1.msra.mxu0 %v114
    %830 = vmatprep.subr.mxu0 %v117
    %831 = vmatpush1.msra.mxu0 %v116
    %832 = vmatprep.subr.mxu0 %v119
    %833 = vmatpush1.msra.mxu0 %v118
    %834 = vmatprep.subr.mxu0 0.0
    %835 = vmatpush1.msra.mxu0 0.0
    %836 = vmatprep.subr.mxu0 0.0
    %837 = vmatpush1.msra.mxu0 0.0
    %838 = vmatprep.subr.mxu0 0.0
    %839 = vmatpush1.msra.mxu0 0.0
    %840 = vmatprep.subr.mxu0 0.0
    %841 = vmatpush1.msra.mxu0 0.0
    %842 = vmatprep.subr.mxu0 0.0
    %843 = vmatpush1.msra.mxu0 0.0
    %844 = vmatprep.subr.mxu0 0.0
    %845 = vmatpush1.msra.mxu0 0.0
    %846 = vmatprep.subr.mxu0 0.0
    %847 = vmatpush1.msra.mxu0 0.0
    %848 = vmatprep.subr.mxu0 0.0
    %849 = vmatpush1.msra.mxu0 0.0
    %850 = vmatprep.subr.mxu0 0.0
    %851 = vmatpush1.msra.mxu0 0.0
    %852 = vmatprep.subr.mxu0 0.0
    %853 = vmatpush1.msra.mxu0 0.0
    %854 = vmatprep.subr.mxu0 0.0
    %855 = vmatpush1.msra.mxu0 0.0
    %856 = vmatprep.subr.mxu0 0.0
    %857 = vmatpush1.msra.mxu0 0.0
    %858 = vmatprep.subr.mxu0 0.0
    %859 = vmatpush1.msra.mxu0 0.0
    %860 = vmatprep.subr.mxu0 0.0
    %861 = vmatpush1.msra.mxu0 0.0
    %862 = vmatprep.subr.mxu0 0.0
    %863 = vmatpush1.msra.mxu0 0.0
    %864 = vmatprep.subr.mxu0 0.0
    %865 = vmatpush1.msra.mxu0 0.0
    %866 = vmatprep.subr.mxu0 0.0
    %867 = vmatpush1.msra.mxu0 0.0
    %868 = vmatprep.subr.mxu0 0.0
    %869 = vmatpush1.msra.mxu0 0.0
    %870 = vmatprep.subr.mxu0 0.0
    %871 = vmatpush1.msra.mxu0 0.0
    %872 = vmatprep.subr.mxu0 0.0
    %873 = vmatpush1.msra.mxu0 0.0
    %874 = vmatprep.subr.mxu0 0.0
    %875 = vmatpush1.msra.mxu0 0.0
    %876 = vmatprep.subr.mxu0 0.0
    %877 = vmatpush1.msra.mxu0 0.0
    %878 = vmatprep.subr.mxu0 0.0
    %879 = vmatpush1.msra.mxu0 0.0
    %880 = vmatprep.subr.mxu0 0.0
    %881 = vmatpush1.msra.mxu0 0.0
    %882 = vmatprep.mubr.f32.mxu0 0.0
    %883 = vmatmul.mubr.f32.gmra.mrb[0].mxu0 %v816
    %v884 = vpop.f32.mrb[0].mxu0
    %v885 = vadd.f32 0.0, %v884
    %v886 = vpop.f32.mrb[0].mxu0
    %v887 = vadd.f32 0.0, %v886
    %888 = vdwg.mxu0
    %v889 = vlaneseq
    %v890 = vshrl.u32 %v889, 7
    %v891 = vsub.s32 0, %v890
    %v892 = vrot.slane %v885, %v891
    %v893 = vlaneseq
    %v894 = vshrl.u32 %v893, 7
    %v895 = vsub.s32 0, %v894
    %v896 = vrot.slane %v887, %v895
    %v898 = vcombine.high %v580, %v580
    %v900 = vmul.f32 %v892, %v580
    %v901 = vmul.f32 %v896, %v898
    %v903 = vsel %vm472, %v900, 0
    %v906 = vsel %vm472, %v901, 0
    %908 = vmatprep.subr.mxu0 %v906
    %909 = vmatpush1.msra.mxu0 %v903
    %910 = vmatprep.subr.mxu0 0.0
    %911 = vmatpush1.msra.mxu0 0.0
    %912 = vmatprep.subr.mxu0 0.0
    %913 = vmatpush1.msra.mxu0 0.0
    %914 = vmatprep.subr.mxu0 0.0
    %915 = vmatpush1.msra.mxu0 0.0
    %916 = vmatprep.subr.mxu0 0.0
    %917 = vmatpush1.msra.mxu0 0.0
    %918 = vmatprep.subr.mxu0 0.0
    %919 = vmatpush1.msra.mxu0 0.0
    %920 = vmatprep.subr.mxu0 0.0
    %921 = vmatpush1.msra.mxu0 0.0
    %922 = vmatprep.subr.mxu0 0.0
    %923 = vmatpush1.msra.mxu0 0.0
    %924 = vmatprep.subr.mxu0 0.0
    %925 = vmatpush1.msra.mxu0 0.0
    %926 = vmatprep.subr.mxu0 0.0
    %927 = vmatpush1.msra.mxu0 0.0
    %928 = vmatprep.subr.mxu0 0.0
    %929 = vmatpush1.msra.mxu0 0.0
    %930 = vmatprep.subr.mxu0 0.0
    %931 = vmatpush1.msra.mxu0 0.0
    %932 = vmatprep.subr.mxu0 0.0
    %933 = vmatpush1.msra.mxu0 0.0
    %934 = vmatprep.subr.mxu0 0.0
    %935 = vmatpush1.msra.mxu0 0.0
    %936 = vmatprep.subr.mxu0 0.0
    %937 = vmatpush1.msra.mxu0 0.0
    %938 = vmatprep.subr.mxu0 0.0
    %939 = vmatpush1.msra.mxu0 0.0
    %940 = vmatprep.subr.mxu0 0.0
    %941 = vmatpush1.msra.mxu0 0.0
    %942 = vmatprep.subr.mxu0 0.0
    %943 = vmatpush1.msra.mxu0 0.0
    %944 = vmatprep.subr.mxu0 0.0
    %945 = vmatpush1.msra.mxu0 0.0
    %946 = vmatprep.subr.mxu0 0.0
    %947 = vmatpush1.msra.mxu0 0.0
    %948 = vmatprep.subr.mxu0 0.0
    %949 = vmatpush1.msra.mxu0 0.0
    %950 = vmatprep.subr.mxu0 0.0
    %951 = vmatpush1.msra.mxu0 0.0
    %952 = vmatprep.subr.mxu0 0.0
    %953 = vmatpush1.msra.mxu0 0.0
    %954 = vmatprep.subr.mxu0 0.0
    %955 = vmatpush1.msra.mxu0 0.0
    %956 = vmatprep.subr.mxu0 0.0
    %957 = vmatpush1.msra.mxu0 0.0
    %958 = vmatprep.subr.mxu0 0.0
    %959 = vmatpush1.msra.mxu0 0.0
    %960 = vmatprep.subr.mxu0 0.0
    %961 = vmatpush1.msra.mxu0 0.0
    %962 = vmatprep.subr.mxu0 0.0
    %963 = vmatpush1.msra.mxu0 0.0
    %964 = vmatprep.subr.mxu0 0.0
    %965 = vmatpush1.msra.mxu0 0.0
    %966 = vmatprep.subr.mxu0 0.0
    %967 = vmatpush1.msra.mxu0 0.0
    %968 = vmatprep.subr.mxu0 0.0
    %969 = vmatpush1.msra.mxu0 0.0
    %970 = vmatprep.subr.mxu0 0.0
    %971 = vmatpush1.msra.mxu0 0.0
    %972 = vmatprep.mubr.f32.mxu0 0.0
    %973 = vmatmul.mubr.f32.gmra.mrb[0].mxu0 %v470
    %v974 = vpop.f32.mrb[0].mxu0
    %v975 = vadd.f32 %v465, %v974
    %v976 = vpop.f32.mrb[0].mxu0
    %v977 = vadd.f32 %v465, %v976
    %978 = vdwg.mxu0
    %v981 = vcombine.low %v885, %v887
    %v983 = vunpack.c.l.s4 1966171168
    %v984 = vunpack.c.0.s8 %v983
    %v985 = vlaneseq
    %v986 = vshrl.u32 %v985, 7
    %v987 = vsub.s32 %v984, %v986
    %v988 = vrot.slane %v981, %v987
    %v990 = vunpack.c.l.s4 1966171168
    %v991 = vunpack.c.0.s8 %v990
    %v992 = vlaneseq
    %v993 = vshrl.u32 %v992, 7
    %v994 = vsub.s32 %v991, %v993
    %v995 = vrot.slane %v988, %v994
    %s997 = scalar_lea.vmem [#allocation12], 2
    %998 = vst.msk [vmem:[%s997] sm:$0x3] %vm571, %v995
    %v999 = vsel %vm472, %v975, 0.0
    %v1000 = vsel %vm472, %v977, 0.0
    %v1001 = vadd.f32 %v999, %v1000
    %1002 = vadd.xlane.f32.xlu0 %v1001
    %v1003 = vpop.xlane.xlu0 %1002
    %v1004 = vadd.f32 %v578, %v1003
    %v1005 = vmul.f32 %v1004, 0.001953125
    %v1006 = vsub.f32 %v546, %v1005
    %v1007 = vsub.f32 %v548, %v1005
    %v1008 = vmul.f32 %v1006, %v1006
    %v1009 = vmul.f32 %v1007, %v1007
    %v1010 = vsel %vm472, %v1008, 0.0
    %v1011 = vsel %vm472, %v1009, 0.0
    %v1012 = vadd.f32 %v1010, %v1011
    %1013 = vadd.xlane.f32.xlu0 %v1012
    %v1014 = vpop.xlane.xlu0 %1013
    %v1015 = vadd.f32 %v1014, 0.0
    %v1016 = vsub.f32 %v975, %v1005
    %v1017 = vsub.f32 %v977, %v1005
    %v1018 = vmul.f32 %v1016, %v1016
    %v1019 = vmul.f32 %v1017, %v1017
    %v1020 = vsel %vm472, %v1018, 0.0
    %v1021 = vsel %vm472, %v1019, 0.0
    %v1022 = vadd.f32 %v1020, %v1021
    %1023 = vadd.xlane.f32.xlu0 %v1022
    %v1024 = vpop.xlane.xlu0 %1023
    %v1025 = vadd.f32 %v1015, %v1024
    %v1026 = vmul.f32 %v1025, 0.001953125
    %v1027 = vadd.f32 %v1026, 1e-05
    %v1028 = vrsqrt.pop %v1027
    %v1029 = vmul.f32 %v95, %v1028
    %v1030 = vmul.f32 %v1005, %v1029
    %1032 = vrot.lane.b32.xlu0 %v1030, 1
    %v1033 = vpop.permute.xlu0 %1032
    %v1035 = vsub.f32 %v95, %v1033
    %1037 = vset.pattern.permute.xlu0 32
    %1038 = vperm.xlu0 %1037, %v1029
    %v1039 = vpop.permute.xlu0 %1038
    %v1041 = vmul.f32 %v546, %v1039
    %v1042 = vmul.f32 %v548, %v1039
    %1044 = vset.pattern.permute.xlu0 33
    %1045 = vperm.xlu0 %1044, %v1035
    %v1046 = vpop.permute.xlu0 %1045
    %v1048 = vadd.f32 %v1041, %v1046
    %v1049 = vadd.f32 %v1042, %v1046
    %v1052 = vcombine.low %v1048, %v1049
    %1054 = vst [vmem:[#allocation11] sm:$0xff] %v1052
    %v1055 = vmul.f32 %v975, %v1039
    %v1056 = vmul.f32 %v977, %v1039
    %v1057 = vadd.f32 %v1055, %v1046
    %v1058 = vadd.f32 %v1056, %v1046
    %v1061 = vcombine.low %v1057, %v1058
    %s1063 = scalar_lea.vmem [#allocation11], 8
    %1064 = vst [vmem:[%s1063] sm:$0xff] %v1061
    // Predicated region
    $region46: #{tpu_custom_call.1} parent=1 // pred_check
      _
    $region47: #{tpu_custom_call.1} parent=1 // pred_check_branch
      %1066 = sbr.rel (0) target = $region49
    $region48: #{tpu_custom_call.1} parent=1 // pred_region
      %s1068 = ssub.s32 256, 256
      %1069 = vsyncadd [#allocation4], %s1068
      %s1070 = sshll.u32 [#allocation11], 4
      %s1071 = int_to_ptr.vmem [resolvable:$true] %s1070
      %1076 = dma.vmem_to_hbm [thread:$0]  %s1071, 256, %s6, [#allocation4], 128, 128, 8
    $region49: #{tpu_custom_call.1} parent=1 // pred_fallthru
      _
    // Predicated region
    $region50: #{tpu_custom_call.1} parent=1 // pred_check
      _
    $region51: #{tpu_custom_call.1} parent=1 // pred_check_branch
      %1078 = sbr.rel (0) target = $region53
    $region52: #{tpu_custom_call.1} parent=1 // pred_region
      %s1080 = ssub.s32 64, 64
      %1081 = vsyncadd [#allocation13], %s1080
      %s1082 = sshll.u32 [#allocation12], 4
      %s1083 = int_to_ptr.vmem [resolvable:$true] %s1082
      %1088 = dma.vmem_to_hbm [thread:$0]  %s1083, 64, %s7, [#allocation13], 32, 32, 2
    $region53: #{tpu_custom_call.1} parent=1 // pred_fallthru
      _
    // Predicated region
    $region54: #{tpu_custom_call.1} parent=1 // pred_check
      _
    $region55: #{tpu_custom_call.1} parent=1 // pred_check_branch
      %1090 = sbr.rel (0) target = $region57
    $region56: #{tpu_custom_call.1} parent=1 // pred_region
      %1091 = dma.done [#allocation4], 256
    $region57: #{tpu_custom_call.1} parent=1 // pred_fallthru
      _
    // Predicated region
    $region58: #{tpu_custom_call.1} parent=1 // pred_check
      _
    $region59: #{tpu_custom_call.1} parent=1 // pred_check_branch
      %1093 = sbr.rel (0) target = $region61
    $region60: #{tpu_custom_call.1} parent=1 // pred_region
      %1094 = dma.done [#allocation13], 64
    $region61: #{tpu_custom_call.1} parent=1 // pred_fallthru
      _
    %1095 = vsyncpa [#allocation3], 1
    %1096 = vsyncpa [#allocation6], 1
    %1097 = vsyncpa [#allocation9], 1
    %1098 = vsyncpa [#allocation4], 1
    %1099 = vsyncpa [#allocation13], 1

</llo_original>
